<compile_context>
chip_gen: v7x
topology: tpu7x:2x2x1
jax: 0.10.0
libtpu: 0.0.40
codegen_flags: <defaults>
</compile_context>

<pallas_src>
import jax
import jax.numpy as jnp
from jax.experimental import pallas as pl
from jax.experimental.pallas import tpu as pltpu


def _round_up(x, m):
    return (x + m - 1) // m * m


# ---------------------------------------------------------------------------
# Kernel A: per-node feature transform, computed exactly once.
#   h = ReLU(x @ Wm + bm) @ Wo
# ---------------------------------------------------------------------------
def feat_kernel(x_ref, wm_ref, bm_ref, wo_ref, h_ref):
    msg = jnp.dot(x_ref[...], wm_ref[...], preferred_element_type=jnp.float32)
    msg = jnp.maximum(msg + bm_ref[...], 0.0)
    h_ref[...] = jnp.dot(msg, wo_ref[...], preferred_element_type=jnp.float32)


# ---------------------------------------------------------------------------
# Kernel B: edge aggregation.
#   out[dst] = sum_src adj[dst, src] * h[src] + bo
# Grid = (dst_tiles, src_tiles); src is the reduction axis (last, "arbitrary"),
# dst tiles are independent ("parallel" -> both TensorCores on v7x).
# ---------------------------------------------------------------------------
def agg_kernel(adj_ref, h_ref, bo_ref, out_ref, acc_ref):
    k = pl.program_id(1)

    @pl.when(k == 0)
    def _():
        acc_ref[...] = jnp.zeros_like(acc_ref)

    # adj stored bf16 (0/1 exact); keep h in f32 for full accuracy.
    acc_ref[...] += jnp.dot(adj_ref[...].astype(jnp.float32), h_ref[...],
                            preferred_element_type=jnp.float32)

    @pl.when(k == pl.num_programs(1) - 1)
    def _():
        out_ref[...] = (acc_ref[...] + bo_ref[...]).astype(out_ref.dtype)


def mp_layer_forward(adj, node_feats, w_msg, b_msg, w_out, b_out, tile_cap=1024):
    n, in_feats = node_feats.shape
    out_feats = w_out.shape[1]

    # Lane-dense padding (multiples of 128) + node padding to the tile size.
    in_pad = _round_up(in_feats, 128)
    out_pad = _round_up(out_feats, 128)
    tile = min(tile_cap, _round_up(n, 128))
    n_pad = _round_up(n, tile)

    x_p = jnp.zeros((n_pad, in_pad), jnp.float32).at[:n, :in_feats].set(node_feats)
    wm_p = jnp.zeros((in_pad, in_pad), jnp.float32).at[:in_feats, :in_feats].set(w_msg)
    bm_p = jnp.zeros((1, in_pad), jnp.float32).at[:, :in_feats].set(b_msg)
    wo_p = jnp.zeros((in_pad, out_pad), jnp.float32).at[:in_feats, :out_feats].set(w_out)
    bo_p = jnp.zeros((1, out_pad), jnp.float32).at[:, :out_feats].set(b_out)
    adj_p = jnp.zeros((n_pad, n_pad), jnp.bfloat16).at[:n, :n].set(
        adj.astype(jnp.bfloat16))

    # --- kernel A: h = ReLU(x @ Wm + bm) @ Wo (N_pad x out_pad) --------------
    h = pl.pallas_call(
        feat_kernel,
        out_shape=jax.ShapeDtypeStruct((n_pad, out_pad), jnp.float32),
        grid=(n_pad // tile,),
        in_specs=[
            pl.BlockSpec((tile, in_pad), lambda i: (i, 0)),
            pl.BlockSpec((in_pad, in_pad), lambda i: (0, 0)),
            pl.BlockSpec((1, in_pad), lambda i: (0, 0)),
            pl.BlockSpec((in_pad, out_pad), lambda i: (0, 0)),
        ],
        out_specs=pl.BlockSpec((tile, out_pad), lambda i: (i, 0)),
        compiler_params=pltpu.CompilerParams(
            dimension_semantics=("parallel",),
            vmem_limit_bytes=32 * 1024 * 1024,
        ),
        cost_estimate=pl.CostEstimate(
            flops=2 * n_pad * in_pad * in_pad + 2 * n_pad * in_pad * out_pad,
            transcendentals=0,
            bytes_accessed=4 * (n_pad * in_pad + in_pad * in_pad
                                + in_pad * out_pad + n_pad * out_pad),
        ),
    )(x_p, wm_p, bm_p, wo_p)

    # --- kernel B: out = adj @ h + bo, tiled over (dst, src) -----------------
    out = pl.pallas_call(
        agg_kernel,
        out_shape=jax.ShapeDtypeStruct((n_pad, out_pad), jnp.float32),
        grid=(n_pad // tile, n_pad // tile),
        in_specs=[
            pl.BlockSpec((tile, tile), lambda i, k: (i, k)),        # adj[dst, src]
            pl.BlockSpec((tile, out_pad), lambda i, k: (k, 0)),     # h[src]
            pl.BlockSpec((1, out_pad), lambda i, k: (0, 0)),        # bo
        ],
        out_specs=pl.BlockSpec((tile, out_pad), lambda i, k: (i, 0)),
        scratch_shapes=[pltpu.VMEM((tile, out_pad), jnp.float32)],
        compiler_params=pltpu.CompilerParams(
            dimension_semantics=("parallel", "arbitrary"),
            vmem_limit_bytes=32 * 1024 * 1024,
        ),
        cost_estimate=pl.CostEstimate(
            flops=2 * n_pad * n_pad * out_pad,
            transcendentals=0,
            bytes_accessed=2 * n_pad * n_pad + 2 * 4 * n_pad * out_pad,
        ),
    )(adj_p, h, bo_p)

    return out[:n, :out_feats]


def reference_forward(adj, x, w_msg, b_msg, w_out, b_out):
    msg = jnp.maximum(x @ w_msg + b_msg, 0.0)
    agg = adj @ msg
    return agg @ w_out + b_out


if __name__ == "__main__":
    # Small, module-consistent shapes: 8 nodes, in_feats=32, out_feats=16.
    num_nodes, in_feats, out_feats = 8, 32, 16

    key = jax.random.PRNGKey(0)
    k_x, k_adj, k_wm, k_bm, k_wo, k_bo = jax.random.split(key, 6)

    # Node features (number_atoms_batched_graph, in_feats)
    node_feats = jax.random.normal(k_x, (num_nodes, in_feats), dtype=jnp.float32)

    # Random sparse-ish directed graph as dense adjacency: adj[dst, src].
    adj = (jax.random.uniform(k_adj, (num_nodes, num_nodes)) < 0.4).astype(jnp.float32)

    # Parameter init mimicking torch.nn.Linear (uniform +/- 1/sqrt(fan_in)).
    bound = 1.0 / jnp.sqrt(jnp.float32(in_feats))
    w_msg = jax.random.uniform(k_wm, (in_feats, in_feats), minval=-bound,
                               maxval=bound, dtype=jnp.float32)
    b_msg = jax.random.uniform(k_bm, (1, in_feats), minval=-bound,
                               maxval=bound, dtype=jnp.float32)
    w_out = jax.random.uniform(k_wo, (in_feats, out_feats), minval=-bound,
                               maxval=bound, dtype=jnp.float32)
    b_out = jax.random.uniform(k_bo, (1, out_feats), minval=-bound,
                               maxval=bound, dtype=jnp.float32)

    out = mp_layer_forward(adj, node_feats, w_msg, b_msg, w_out, b_out)
    out = jax.block_until_ready(out)

    ref = reference_forward(adj, node_feats, w_msg, b_msg, w_out, b_out)
    assert out.shape == (num_nodes, out_feats)
    assert jnp.allclose(out, ref, atol=1e-4, rtol=1e-4), \
        float(jnp.max(jnp.abs(out - ref)))

    print("KERNEL_OK")
</pallas_src>

<mosaic_0001>
module attributes {stable_mosaic.version = 11 : i64} {
  func.func @feat_kernel(%arg0: i32, %arg1: memref<128x128xf32, #tpu.memory_space<vmem>>, %arg2: memref<128x128xf32, #tpu.memory_space<vmem>>, %arg3: memref<1x128xf32, #tpu.memory_space<vmem>>, %arg4: memref<128x128xf32, #tpu.memory_space<vmem>>, %arg5: memref<128x128xf32, #tpu.memory_space<vmem>>) attributes {dimension_semantics = [#tpu.dimension_semantics<parallel>], iteration_bounds = array<i64: 1>, scalar_prefetch = 0 : i64, scratch_operands = 0 : i64, tpu.core_type = #tpu.core_type<tc>, window_params = [{transform_indices = @transform_0, window_bounds = array<i64: 128, 128>}, {pipeline_mode = #tpu.pipeline_mode<synchronous>, transform_indices = @transform_1, window_bounds = array<i64: 128, 128>}, {pipeline_mode = #tpu.pipeline_mode<synchronous>, transform_indices = @transform_2, window_bounds = array<i64: 1, 128>}, {pipeline_mode = #tpu.pipeline_mode<synchronous>, transform_indices = @transform_3, window_bounds = array<i64: 128, 128>}, {transform_indices = @transform_4, window_bounds = array<i64: 128, 128>}]} {
    %c0 = arith.constant 0 : index
    %c0_0 = arith.constant 0 : index
    %0 = vector.load %arg1[%c0, %c0_0] : memref<128x128xf32, #tpu.memory_space<vmem>>, vector<128x128xf32>
    %c0_1 = arith.constant 0 : index
    %c0_2 = arith.constant 0 : index
    %1 = vector.load %arg2[%c0_1, %c0_2] : memref<128x128xf32, #tpu.memory_space<vmem>>, vector<128x128xf32>
    %cst = arith.constant dense<0.000000e+00> : vector<128x128xf32>
    %2 = tpu.matmul %0, %1, %cst {dimension_numbers = #tpu.dot_dimension_numbers<[1], [0], [0], [1], [0, 0, 1, 1], [], []>} : vector<128x128xf32>, vector<128x128xf32>, vector<128x128xf32> -> vector<128x128xf32>
    %c0_3 = arith.constant 0 : index
    %c0_4 = arith.constant 0 : index
    %3 = vector.load %arg3[%c0_3, %c0_4] : memref<1x128xf32, #tpu.memory_space<vmem>>, vector<1x128xf32>
    %4 = vector.broadcast %3 : vector<1x128xf32> to vector<128x128xf32>
    %5 = arith.addf %2, %4 : vector<128x128xf32>
    %cst_5 = arith.constant 0.000000e+00 : f32
    %6 = vector.broadcast %cst_5 : f32 to vector<128x128xf32>
    %7 = arith.maximumf %5, %6 : vector<128x128xf32>
    %c0_6 = arith.constant 0 : index
    %c0_7 = arith.constant 0 : index
    %8 = vector.load %arg4[%c0_6, %c0_7] : memref<128x128xf32, #tpu.memory_space<vmem>>, vector<128x128xf32>
    %cst_8 = arith.constant dense<0.000000e+00> : vector<128x128xf32>
    %9 = tpu.matmul %7, %8, %cst_8 {dimension_numbers = #tpu.dot_dimension_numbers<[1], [0], [0], [1], [0, 0, 1, 1], [], []>} : vector<128x128xf32>, vector<128x128xf32>, vector<128x128xf32> -> vector<128x128xf32>
    %c0_9 = arith.constant 0 : index
    %c0_10 = arith.constant 0 : index
    %10 = vector.load %arg5[%c0_9, %c0_10] : memref<128x128xf32, #tpu.memory_space<vmem>>, vector<128x128xf32>
    tpu.vector_store %arg5[%c0_9, %c0_10], %9 {strides = array<i32>} : memref<128x128xf32, #tpu.memory_space<vmem>>, vector<128x128xf32>,
    return
  }
  func.func @transform_0(%arg0: i32) -> (i32, i32) {
    %c0_i32 = arith.constant 0 : i32
    %c0_i32_0 = arith.constant 0 : i32
    return %arg0, %c0_i32 : i32, i32
  }
  func.func @transform_1(%arg0: i32) -> (i32, i32) {
    %c0_i32 = arith.constant 0 : i32
    %c0_i32_0 = arith.constant 0 : i32
    %c0_i32_1 = arith.constant 0 : i32
    return %c0_i32, %c0_i32_0 : i32, i32
  }
  func.func @transform_2(%arg0: i32) -> (i32, i32) {
    %c0_i32 = arith.constant 0 : i32
    %c0_i32_0 = arith.constant 0 : i32
    %c0_i32_1 = arith.constant 0 : i32
    return %c0_i32, %c0_i32_0 : i32, i32
  }
  func.func @transform_3(%arg0: i32) -> (i32, i32) {
    %c0_i32 = arith.constant 0 : i32
    %c0_i32_0 = arith.constant 0 : i32
    %c0_i32_1 = arith.constant 0 : i32
    return %c0_i32, %c0_i32_0 : i32, i32
  }
  func.func @transform_4(%arg0: i32) -> (i32, i32) {
    %c0_i32 = arith.constant 0 : i32
    %c0_i32_0 = arith.constant 0 : i32
    return %arg0, %c0_i32 : i32, i32
  }
}

</mosaic_0001>

<llo_original>
// kernel: tpu_custom_call.1
$region0: #{tpu_custom_call.1}
  #allocation0 [shape = 'u32[]', space=smem, size = 0x4, offset = 0x4, fixed_abs, tag = 'smem constant byte address 0x4 - core index']
  #allocation1 [shape = 'u32[144,128]{1,0:T(1,128)}', space=vmem, size = 0x12000, scoped, tag = 'internal scratch']
  %s0 = inlined_call_operand.hbm [shape: f32[128,128], index: 0, kind: input, shape index: {}]
  %s1 = inlined_call_operand.hbm [shape: f32[128,128], index: 1, kind: input, shape index: {}]
  %s2 = inlined_call_operand.vmem [shape: f32[1,128], index: 2, kind: input, shape index: {}]
  %s3 = inlined_call_operand.hbm [shape: f32[128,128], index: 3, kind: input, shape index: {}]
  %s4 = inlined_call_operand.hbm [shape: f32[128,128], index: 4, kind: output, shape index: {}]
  %s5 = sld [smem:[#allocation0]]
  $region38: #{tpu_custom_call.1} parent=0
    _
  %s7 = ssub.s32 1, %s5
  %s8 = scalar_select 0, %s7, %s5
  $region1: #{tpu_custom_call.1} parent=0
    #allocation2 [shape = 'u8[65536]{0}', space=vmem, size = 0x10000, scoped, tag = 'input window, operand 0, single buffered']
    #allocation3 [shape = 's32[1]{0}', space=sflag, size = 0x4, scoped, tag = 'scoped memory for tpu_custom_call.1']
    #allocation4 [shape = 's32[1]{0}', space=sflag, size = 0x4, scoped, tag = 'scoped memory for tpu_custom_call.1']
    #allocation5 [shape = 'u8[65536]{0}', space=vmem, size = 0x10000, scoped, tag = 'input window, operand 1, single buffered']
    #allocation6 [shape = 's32[1]{0}', space=sflag, size = 0x4, scoped, tag = 'scoped memory for tpu_custom_call.1']
    #allocation7 [shape = 'u8[65536]{0}', space=vmem, size = 0x10000, scoped, tag = 'input window, operand 3, single buffered']
    #allocation8 [shape = 'u8[65536]{0}', space=vmem, size = 0x10000, scoped, tag = 'output window, operand 0, single buffered']
    %9 = vsyncpa [#allocation3], 0
    %10 = vsyncpa [#allocation6], 0
    %11 = vsyncpa [#allocation4], 0
    // Predicated region
    $region2: #{tpu_custom_call.1} parent=1 // pred_check
      _
    $region3: #{tpu_custom_call.1} parent=1 // pred_check_branch
      %13 = sbr.rel (0) target = $region5
    $region4: #{tpu_custom_call.1} parent=1 // pred_region
      %s15 = ssub.s32 2048, 2048
      %16 = vsyncadd [#allocation3], %s15
      %s17 = sshll.u32 [#allocation2], 4
      %s18 = int_to_ptr.vmem [resolvable:$true] %s17
      %23 = dma.hbm_to_vmem [thread:$0]  %s0, 2048, %s18, [#allocation3], 128, 128, 8
    $region5: #{tpu_custom_call.1} parent=1 // pred_fallthru
      _
    // Predicated region
    $region6: #{tpu_custom_call.1} parent=1 // pred_check
      _
    $region7: #{tpu_custom_call.1} parent=1 // pred_check_branch
      %25 = sbr.rel (0) target = $region9
    $region8: #{tpu_custom_call.1} parent=1 // pred_region
      %s27 = ssub.s32 2048, 2048
      %28 = vsyncadd [#allocation6], %s27
      %s29 = sshll.u32 [#allocation5], 4
      %s30 = int_to_ptr.vmem [resolvable:$true] %s29
      %35 = dma.hbm_to_vmem [thread:$0]  %s1, 2048, %s30, [#allocation6], 128, 128, 8
    $region9: #{tpu_custom_call.1} parent=1 // pred_fallthru
      _
    // Predicated region
    $region10: #{tpu_custom_call.1} parent=1 // pred_check
      _
    $region11: #{tpu_custom_call.1} parent=1 // pred_check_branch
      %37 = sbr.rel (0) target = $region13
    $region12: #{tpu_custom_call.1} parent=1 // pred_region
      _
    $region13: #{tpu_custom_call.1} parent=1 // pred_fallthru
      _
    // Predicated region
    $region14: #{tpu_custom_call.1} parent=1 // pred_check
      _
    $region15: #{tpu_custom_call.1} parent=1 // pred_check_branch
      %39 = sbr.rel (0) target = $region17
    $region16: #{tpu_custom_call.1} parent=1 // pred_region
      %s41 = ssub.s32 2048, 2048
      %42 = vsyncadd [#allocation6], %s41
      %s43 = sshll.u32 [#allocation7], 4
      %s44 = int_to_ptr.vmem [resolvable:$true] %s43
      %49 = dma.hbm_to_vmem [thread:$0]  %s3, 2048, %s44, [#allocation6], 128, 128, 8
    $region17: #{tpu_custom_call.1} parent=1 // pred_fallthru
      _
    // Predicated region
    $region18: #{tpu_custom_call.1} parent=1 // pred_check
      _
    $region19: #{tpu_custom_call.1} parent=1 // pred_check_branch
      %51 = sbr.rel (0) target = $region21
    $region20: #{tpu_custom_call.1} parent=1 // pred_region
      %52 = dma.done [#allocation3], 2048
    $region21: #{tpu_custom_call.1} parent=1 // pred_fallthru
      _
    // Predicated region
    $region22: #{tpu_custom_call.1} parent=1 // pred_check
      _
    $region23: #{tpu_custom_call.1} parent=1 // pred_check_branch
      %54 = sbr.rel (0) target = $region25
    $region24: #{tpu_custom_call.1} parent=1 // pred_region
      %55 = dma.done [#allocation6], 2048
    $region25: #{tpu_custom_call.1} parent=1 // pred_fallthru
      _
    // Predicated region
    $region26: #{tpu_custom_call.1} parent=1 // pred_check
      _
    $region27: #{tpu_custom_call.1} parent=1 // pred_check_branch
      %57 = sbr.rel (0) target = $region29
    $region28: #{tpu_custom_call.1} parent=1 // pred_region
      %58 = dma.done [#allocation6], 2048
    $region29: #{tpu_custom_call.1} parent=1 // pred_fallthru
      _
    %v59 = vld [vmem:[#allocation2] sm:$0xff]
    %v60 = vld [vmem:[#allocation2 + $0x8] sm:$0xff]
    %v61 = vld [vmem:[#allocation2 + $0x10] sm:$0xff]
    %v62 = vld [vmem:[#allocation2 + $0x18] sm:$0xff]
    %v63 = vld [vmem:[#allocation2 + $0x20] sm:$0xff]
    %v64 = vld [vmem:[#allocation2 + $0x28] sm:$0xff]
    %v65 = vld [vmem:[#allocation2 + $0x30] sm:$0xff]
    %v66 = vld [vmem:[#allocation2 + $0x38] sm:$0xff]
    %v67 = vld [vmem:[#allocation2 + $0x40] sm:$0xff]
    %v68 = vld [vmem:[#allocation2 + $0x48] sm:$0xff]
    %v69 = vld [vmem:[#allocation2 + $0x50] sm:$0xff]
    %v70 = vld [vmem:[#allocation2 + $0x58] sm:$0xff]
    %v71 = vld [vmem:[#allocation2 + $0x60] sm:$0xff]
    %v72 = vld [vmem:[#allocation2 + $0x68] sm:$0xff]
    %v73 = vld [vmem:[#allocation2 + $0x70] sm:$0xff]
    %v74 = vld [vmem:[#allocation2 + $0x78] sm:$0xff]
    %v75 = vld [vmem:[#allocation5] sm:$0xff]
    %v76 = vld [vmem:[#allocation5 + $0x8] sm:$0xff]
    %v77 = vld [vmem:[#allocation5 + $0x10] sm:$0xff]
    %v78 = vld [vmem:[#allocation5 + $0x18] sm:$0xff]
    %v79 = vld [vmem:[#allocation5 + $0x20] sm:$0xff]
    %v80 = vld [vmem:[#allocation5 + $0x28] sm:$0xff]
    %v81 = vld [vmem:[#allocation5 + $0x30] sm:$0xff]
    %v82 = vld [vmem:[#allocation5 + $0x38] sm:$0xff]
    %v83 = vld [vmem:[#allocation5 + $0x40] sm:$0xff]
    %v84 = vld [vmem:[#allocation5 + $0x48] sm:$0xff]
    %v85 = vld [vmem:[#allocation5 + $0x50] sm:$0xff]
    %v86 = vld [vmem:[#allocation5 + $0x58] sm:$0xff]
    %v87 = vld [vmem:[#allocation5 + $0x60] sm:$0xff]
    %v88 = vld [vmem:[#allocation5 + $0x68] sm:$0xff]
    %v89 = vld [vmem:[#allocation5 + $0x70] sm:$0xff]
    %v90 = vld [vmem:[#allocation5 + $0x78] sm:$0xff]
    %v91 = vld [vmem:[%s2] sm:$0x1]
    %v93 = vlaneseq
    %v94 = vshrl.u32 %v93, 7
    %v95 = vsub.s32 0, %v94
    %v96 = vrot.slane %v91, %v95
    %98 = vmatprep.subr.mxu0 0.0
    %99 = vmatpush1.msra.mxu0 %v75
    %100 = vmatprep.subr.mxu0 0.0
    %101 = vmatpush1.msra.mxu0 %v76
    %102 = vmatprep.subr.mxu0 0.0
    %103 = vmatpush1.msra.mxu0 %v77
    %104 = vmatprep.subr.mxu0 0.0
    %105 = vmatpush1.msra.mxu0 %v78
    %106 = vmatprep.subr.mxu0 0.0
    %107 = vmatpush1.msra.mxu0 %v79
    %108 = vmatprep.subr.mxu0 0.0
    %109 = vmatpush1.msra.mxu0 %v80
    %110 = vmatprep.subr.mxu0 0.0
    %111 = vmatpush1.msra.mxu0 %v81
    %112 = vmatprep.subr.mxu0 0.0
    %113 = vmatpush1.msra.mxu0 %v82
    %114 = vmatprep.subr.mxu0 0.0
    %115 = vmatpush1.msra.mxu0 %v83
    %116 = vmatprep.subr.mxu0 0.0
    %117 = vmatpush1.msra.mxu0 %v84
    %118 = vmatprep.subr.mxu0 0.0
    %119 = vmatpush1.msra.mxu0 %v85
    %120 = vmatprep.subr.mxu0 0.0
    %121 = vmatpush1.msra.mxu0 %v86
    %122 = vmatprep.subr.mxu0 0.0
    %123 = vmatpush1.msra.mxu0 %v87
    %124 = vmatprep.subr.mxu0 0.0
    %125 = vmatpush1.msra.mxu0 %v88
    %126 = vmatprep.subr.mxu0 0.0
    %127 = vmatpush1.msra.mxu0 %v89
    %128 = vmatprep.subr.mxu0 0.0
    %129 = vmatpush1.msra.mxu0 %v90
    %130 = vmatprep.subr.mxu0 0.0
    %131 = vmatpush1.msra.mxu0 0.0
    %132 = vmatprep.subr.mxu0 0.0
    %133 = vmatpush1.msra.mxu0 0.0
    %134 = vmatprep.subr.mxu0 0.0
    %135 = vmatpush1.msra.mxu0 0.0
    %136 = vmatprep.subr.mxu0 0.0
    %137 = vmatpush1.msra.mxu0 0.0
    %138 = vmatprep.subr.mxu0 0.0
    %139 = vmatpush1.msra.mxu0 0.0
    %140 = vmatprep.subr.mxu0 0.0
    %141 = vmatpush1.msra.mxu0 0.0
    %142 = vmatprep.subr.mxu0 0.0
    %143 = vmatpush1.msra.mxu0 0.0
    %144 = vmatprep.subr.mxu0 0.0
    %145 = vmatpush1.msra.mxu0 0.0
    %146 = vmatprep.subr.mxu0 0.0
    %147 = vmatpush1.msra.mxu0 0.0
    %148 = vmatprep.subr.mxu0 0.0
    %149 = vmatpush1.msra.mxu0 0.0
    %150 = vmatprep.subr.mxu0 0.0
    %151 = vmatpush1.msra.mxu0 0.0
    %152 = vmatprep.subr.mxu0 0.0
    %153 = vmatpush1.msra.mxu0 0.0
    %154 = vmatprep.subr.mxu0 0.0
    %155 = vmatpush1.msra.mxu0 0.0
    %156 = vmatprep.subr.mxu0 0.0
    %157 = vmatpush1.msra.mxu0 0.0
    %158 = vmatprep.subr.mxu0 0.0
    %159 = vmatpush1.msra.mxu0 0.0
    %160 = vmatprep.subr.mxu0 0.0
    %161 = vmatpush1.msra.mxu0 0.0
    %162 = vmatprep.mubr.f32.mxu0 0.0
    %163 = vmatmul.mubr.f32.gmra.mrb[0].mxu0 %v59
    %v164 = vpop.f32.mrb[0].mxu0
    %v165 = vadd.f32 %v96, %v164
    %v166 = vpop.f32.mrb[0].mxu0
    %167 = vmatprep.mubr.f32.mxu0 0.0
    %168 = vmatmul.mubr.f32.gmra.mrb[0].mxu0 %v60
    %v169 = vpop.f32.mrb[0].mxu0
    %v170 = vadd.f32 %v96, %v169
    %v171 = vpop.f32.mrb[0].mxu0
    %172 = vmatprep.mubr.f32.mxu0 0.0
    %173 = vmatmul.mubr.f32.gmra.mrb[0].mxu0 %v61
    %v174 = vpop.f32.mrb[0].mxu0
    %v175 = vadd.f32 %v96, %v174
    %v176 = vpop.f32.mrb[0].mxu0
    %177 = vmatprep.mubr.f32.mxu0 0.0
    %178 = vmatmul.mubr.f32.gmra.mrb[0].mxu0 %v62
    %v179 = vpop.f32.mrb[0].mxu0
    %v180 = vadd.f32 %v96, %v179
    %v181 = vpop.f32.mrb[0].mxu0
    %182 = vmatprep.mubr.f32.mxu0 0.0
    %183 = vmatmul.mubr.f32.gmra.mrb[0].mxu0 %v63
    %v184 = vpop.f32.mrb[0].mxu0
    %v185 = vadd.f32 %v96, %v184
    %v186 = vpop.f32.mrb[0].mxu0
    %187 = vmatprep.mubr.f32.mxu0 0.0
    %188 = vmatmul.mubr.f32.gmra.mrb[0].mxu0 %v64
    %v189 = vpop.f32.mrb[0].mxu0
    %v190 = vadd.f32 %v96, %v189
    %v191 = vpop.f32.mrb[0].mxu0
    %192 = vmatprep.mubr.f32.mxu0 0.0
    %193 = vmatmul.mubr.f32.gmra.mrb[0].mxu0 %v65
    %v194 = vpop.f32.mrb[0].mxu0
    %v195 = vadd.f32 %v96, %v194
    %v196 = vpop.f32.mrb[0].mxu0
    %197 = vmatprep.mubr.f32.mxu0 0.0
    %198 = vmatmul.mubr.f32.gmra.mrb[0].mxu0 %v66
    %v199 = vpop.f32.mrb[0].mxu0
    %v200 = vadd.f32 %v96, %v199
    %v201 = vpop.f32.mrb[0].mxu0
    %202 = vmatprep.mubr.f32.mxu0 0.0
    %203 = vmatmul.mubr.f32.gmra.mrb[0].mxu0 %v67
    %v204 = vpop.f32.mrb[0].mxu0
    %v205 = vadd.f32 %v96, %v204
    %v206 = vpop.f32.mrb[0].mxu0
    %207 = vmatprep.mubr.f32.mxu0 0.0
    %208 = vmatmul.mubr.f32.gmra.mrb[0].mxu0 %v68
    %v209 = vpop.f32.mrb[0].mxu0
    %v210 = vadd.f32 %v96, %v209
    %v211 = vpop.f32.mrb[0].mxu0
    %212 = vmatprep.mubr.f32.mxu0 0.0
    %213 = vmatmul.mubr.f32.gmra.mrb[0].mxu0 %v69
    %v214 = vpop.f32.mrb[0].mxu0
    %v215 = vadd.f32 %v96, %v214
    %v216 = vpop.f32.mrb[0].mxu0
    %217 = vmatprep.mubr.f32.mxu0 0.0
    %218 = vmatmul.mubr.f32.gmra.mrb[0].mxu0 %v70
    %v219 = vpop.f32.mrb[0].mxu0
    %v220 = vadd.f32 %v96, %v219
    %v221 = vpop.f32.mrb[0].mxu0
    %222 = vmatprep.mubr.f32.mxu0 0.0
    %223 = vmatmul.mubr.f32.gmra.mrb[0].mxu0 %v71
    %v224 = vpop.f32.mrb[0].mxu0
    %v225 = vadd.f32 %v96, %v224
    %v226 = vpop.f32.mrb[0].mxu0
    %227 = vmatprep.mubr.f32.mxu0 0.0
    %228 = vmatmul.mubr.f32.gmra.mrb[0].mxu0 %v72
    %v229 = vpop.f32.mrb[0].mxu0
    %v230 = vadd.f32 %v96, %v229
    %v231 = vpop.f32.mrb[0].mxu0
    %232 = vmatprep.mubr.f32.mxu0 0.0
    %233 = vmatmul.mubr.f32.gmra.mrb[0].mxu0 %v73
    %v234 = vpop.f32.mrb[0].mxu0
    %v235 = vadd.f32 %v96, %v234
    %v236 = vpop.f32.mrb[0].mxu0
    %237 = vmatprep.mubr.f32.mxu0 0.0
    %238 = vmatmul.mubr.f32.gmra.mrb[0].mxu0 %v74
    %v239 = vpop.f32.mrb[0].mxu0
    %v240 = vadd.f32 %v96, %v239
    %v241 = vpop.f32.mrb[0].mxu0
    %242 = vdwg.mxu0
    %v243 = vmax.f32 %v165, 0.0
    %v244 = vmax.f32 %v170, 0.0
    %v245 = vmax.f32 %v175, 0.0
    %v246 = vmax.f32 %v180, 0.0
    %v247 = vmax.f32 %v185, 0.0
    %v248 = vmax.f32 %v190, 0.0
    %v249 = vmax.f32 %v195, 0.0
    %v250 = vmax.f32 %v200, 0.0
    %v251 = vmax.f32 %v205, 0.0
    %v252 = vmax.f32 %v210, 0.0
    %v253 = vmax.f32 %v215, 0.0
    %v254 = vmax.f32 %v220, 0.0
    %v255 = vmax.f32 %v225, 0.0
    %v256 = vmax.f32 %v230, 0.0
    %v257 = vmax.f32 %v235, 0.0
    %v258 = vmax.f32 %v240, 0.0
    %v259 = vld [vmem:[#allocation7] sm:$0xff]
    %v260 = vld [vmem:[#allocation7 + $0x8] sm:$0xff]
    %v261 = vld [vmem:[#allocation7 + $0x10] sm:$0xff]
    %v262 = vld [vmem:[#allocation7 + $0x18] sm:$0xff]
    %v263 = vld [vmem:[#allocation7 + $0x20] sm:$0xff]
    %v264 = vld [vmem:[#allocation7 + $0x28] sm:$0xff]
    %v265 = vld [vmem:[#allocation7 + $0x30] sm:$0xff]
    %v266 = vld [vmem:[#allocation7 + $0x38] sm:$0xff]
    %v267 = vld [vmem:[#allocation7 + $0x40] sm:$0xff]
    %v268 = vld [vmem:[#allocation7 + $0x48] sm:$0xff]
    %v269 = vld [vmem:[#allocation7 + $0x50] sm:$0xff]
    %v270 = vld [vmem:[#allocation7 + $0x58] sm:$0xff]
    %v271 = vld [vmem:[#allocation7 + $0x60] sm:$0xff]
    %v272 = vld [vmem:[#allocation7 + $0x68] sm:$0xff]
    %v273 = vld [vmem:[#allocation7 + $0x70] sm:$0xff]
    %v274 = vld [vmem:[#allocation7 + $0x78] sm:$0xff]
    %275 = vmatprep.subr.mxu0 0.0
    %276 = vmatpush1.msra.mxu0 %v259
    %277 = vmatprep.subr.mxu0 0.0
    %278 = vmatpush1.msra.mxu0 %v260
    %279 = vmatprep.subr.mxu0 0.0
    %280 = vmatpush1.msra.mxu0 %v261
    %281 = vmatprep.subr.mxu0 0.0
    %282 = vmatpush1.msra.mxu0 %v262
    %283 = vmatprep.subr.mxu0 0.0
    %284 = vmatpush1.msra.mxu0 %v263
    %285 = vmatprep.subr.mxu0 0.0
    %286 = vmatpush1.msra.mxu0 %v264
    %287 = vmatprep.subr.mxu0 0.0
    %288 = vmatpush1.msra.mxu0 %v265
    %289 = vmatprep.subr.mxu0 0.0
    %290 = vmatpush1.msra.mxu0 %v266
    %291 = vmatprep.subr.mxu0 0.0
    %292 = vmatpush1.msra.mxu0 %v267
    %293 = vmatprep.subr.mxu0 0.0
    %294 = vmatpush1.msra.mxu0 %v268
    %295 = vmatprep.subr.mxu0 0.0
    %296 = vmatpush1.msra.mxu0 %v269
    %297 = vmatprep.subr.mxu0 0.0
    %298 = vmatpush1.msra.mxu0 %v270
    %299 = vmatprep.subr.mxu0 0.0
    %300 = vmatpush1.msra.mxu0 %v271
    %301 = vmatprep.subr.mxu0 0.0
    %302 = vmatpush1.msra.mxu0 %v272
    %303 = vmatprep.subr.mxu0 0.0
    %304 = vmatpush1.msra.mxu0 %v273
    %305 = vmatprep.subr.mxu0 0.0
    %306 = vmatpush1.msra.mxu0 %v274
    %307 = vmatprep.subr.mxu0 0.0
    %308 = vmatpush1.msra.mxu0 0.0
    %309 = vmatprep.subr.mxu0 0.0
    %310 = vmatpush1.msra.mxu0 0.0
    %311 = vmatprep.subr.mxu0 0.0
    %312 = vmatpush1.msra.mxu0 0.0
    %313 = vmatprep.subr.mxu0 0.0
    %314 = vmatpush1.msra.mxu0 0.0
    %315 = vmatprep.subr.mxu0 0.0
    %316 = vmatpush1.msra.mxu0 0.0
    %317 = vmatprep.subr.mxu0 0.0
    %318 = vmatpush1.msra.mxu0 0.0
    %319 = vmatprep.subr.mxu0 0.0
    %320 = vmatpush1.msra.mxu0 0.0
    %321 = vmatprep.subr.mxu0 0.0
    %322 = vmatpush1.msra.mxu0 0.0
    %323 = vmatprep.subr.mxu0 0.0
    %324 = vmatpush1.msra.mxu0 0.0
    %325 = vmatprep.subr.mxu0 0.0
    %326 = vmatpush1.msra.mxu0 0.0
    %327 = vmatprep.subr.mxu0 0.0
    %328 = vmatpush1.msra.mxu0 0.0
    %329 = vmatprep.subr.mxu0 0.0
    %330 = vmatpush1.msra.mxu0 0.0
    %331 = vmatprep.subr.mxu0 0.0
    %332 = vmatpush1.msra.mxu0 0.0
    %333 = vmatprep.subr.mxu0 0.0
    %334 = vmatpush1.msra.mxu0 0.0
    %335 = vmatprep.subr.mxu0 0.0
    %336 = vmatpush1.msra.mxu0 0.0
    %337 = vmatprep.subr.mxu0 0.0
    %338 = vmatpush1.msra.mxu0 0.0
    %339 = vmatprep.mubr.f32.mxu0 0.0
    %340 = vmatmul.mubr.f32.gmra.mrb[0].mxu0 %v243
    %v341 = vpop.f32.mrb[0].mxu0
    %v342 = vadd.f32 0.0, %v341
    %v343 = vpop.f32.mrb[0].mxu0
    %344 = vmatprep.mubr.f32.mxu0 0.0
    %345 = vmatmul.mubr.f32.gmra.mrb[0].mxu0 %v244
    %v346 = vpop.f32.mrb[0].mxu0
    %v347 = vadd.f32 0.0, %v346
    %v348 = vpop.f32.mrb[0].mxu0
    %349 = vmatprep.mubr.f32.mxu0 0.0
    %350 = vmatmul.mubr.f32.gmra.mrb[0].mxu0 %v245
    %v351 = vpop.f32.mrb[0].mxu0
    %v352 = vadd.f32 0.0, %v351
    %v353 = vpop.f32.mrb[0].mxu0
    %354 = vmatprep.mubr.f32.mxu0 0.0
    %355 = vmatmul.mubr.f32.gmra.mrb[0].mxu0 %v246
    %v356 = vpop.f32.mrb[0].mxu0
    %v357 = vadd.f32 0.0, %v356
    %v358 = vpop.f32.mrb[0].mxu0
    %359 = vmatprep.mubr.f32.mxu0 0.0
    %360 = vmatmul.mubr.f32.gmra.mrb[0].mxu0 %v247
    %v361 = vpop.f32.mrb[0].mxu0
    %v362 = vadd.f32 0.0, %v361
    %v363 = vpop.f32.mrb[0].mxu0
    %364 = vmatprep.mubr.f32.mxu0 0.0
    %365 = vmatmul.mubr.f32.gmra.mrb[0].mxu0 %v248
    %v366 = vpop.f32.mrb[0].mxu0
    %v367 = vadd.f32 0.0, %v366
    %v368 = vpop.f32.mrb[0].mxu0
    %369 = vmatprep.mubr.f32.mxu0 0.0
    %370 = vmatmul.mubr.f32.gmra.mrb[0].mxu0 %v249
    %v371 = vpop.f32.mrb[0].mxu0
    %v372 = vadd.f32 0.0, %v371
    %v373 = vpop.f32.mrb[0].mxu0
    %374 = vmatprep.mubr.f32.mxu0 0.0
    %375 = vmatmul.mubr.f32.gmra.mrb[0].mxu0 %v250
    %v376 = vpop.f32.mrb[0].mxu0
    %v377 = vadd.f32 0.0, %v376
    %v378 = vpop.f32.mrb[0].mxu0
    %379 = vmatprep.mubr.f32.mxu0 0.0
    %380 = vmatmul.mubr.f32.gmra.mrb[0].mxu0 %v251
    %v381 = vpop.f32.mrb[0].mxu0
    %v382 = vadd.f32 0.0, %v381
    %v383 = vpop.f32.mrb[0].mxu0
    %384 = vmatprep.mubr.f32.mxu0 0.0
    %385 = vmatmul.mubr.f32.gmra.mrb[0].mxu0 %v252
    %v386 = vpop.f32.mrb[0].mxu0
    %v387 = vadd.f32 0.0, %v386
    %v388 = vpop.f32.mrb[0].mxu0
    %389 = vmatprep.mubr.f32.mxu0 0.0
    %390 = vmatmul.mubr.f32.gmra.mrb[0].mxu0 %v253
    %v391 = vpop.f32.mrb[0].mxu0
    %v392 = vadd.f32 0.0, %v391
    %v393 = vpop.f32.mrb[0].mxu0
    %394 = vmatprep.mubr.f32.mxu0 0.0
    %395 = vmatmul.mubr.f32.gmra.mrb[0].mxu0 %v254
    %v396 = vpop.f32.mrb[0].mxu0
    %v397 = vadd.f32 0.0, %v396
    %v398 = vpop.f32.mrb[0].mxu0
    %399 = vmatprep.mubr.f32.mxu0 0.0
    %400 = vmatmul.mubr.f32.gmra.mrb[0].mxu0 %v255
    %v401 = vpop.f32.mrb[0].mxu0
    %v402 = vadd.f32 0.0, %v401
    %v403 = vpop.f32.mrb[0].mxu0
    %404 = vmatprep.mubr.f32.mxu0 0.0
    %405 = vmatmul.mubr.f32.gmra.mrb[0].mxu0 %v256
    %v406 = vpop.f32.mrb[0].mxu0
    %v407 = vadd.f32 0.0, %v406
    %v408 = vpop.f32.mrb[0].mxu0
    %409 = vmatprep.mubr.f32.mxu0 0.0
    %410 = vmatmul.mubr.f32.gmra.mrb[0].mxu0 %v257
    %v411 = vpop.f32.mrb[0].mxu0
    %v412 = vadd.f32 0.0, %v411
    %v413 = vpop.f32.mrb[0].mxu0
    %414 = vmatprep.mubr.f32.mxu0 0.0
    %415 = vmatmul.mubr.f32.gmra.mrb[0].mxu0 %v258
    %v416 = vpop.f32.mrb[0].mxu0
    %v417 = vadd.f32 0.0, %v416
    %v418 = vpop.f32.mrb[0].mxu0
    %419 = vdwg.mxu0
    %420 = vst [vmem:[#allocation8] sm:$0xff] %v342
    %421 = vst [vmem:[#allocation8 + $0x8] sm:$0xff] %v347
    %422 = vst [vmem:[#allocation8 + $0x10] sm:$0xff] %v352
    %423 = vst [vmem:[#allocation8 + $0x18] sm:$0xff] %v357
    %424 = vst [vmem:[#allocation8 + $0x20] sm:$0xff] %v362
    %425 = vst [vmem:[#allocation8 + $0x28] sm:$0xff] %v367
    %426 = vst [vmem:[#allocation8 + $0x30] sm:$0xff] %v372
    %427 = vst [vmem:[#allocation8 + $0x38] sm:$0xff] %v377
    %428 = vst [vmem:[#allocation8 + $0x40] sm:$0xff] %v382
    %429 = vst [vmem:[#allocation8 + $0x48] sm:$0xff] %v387
    %430 = vst [vmem:[#allocation8 + $0x50] sm:$0xff] %v392
    %431 = vst [vmem:[#allocation8 + $0x58] sm:$0xff] %v397
    %432 = vst [vmem:[#allocation8 + $0x60] sm:$0xff] %v402
    %433 = vst [vmem:[#allocation8 + $0x68] sm:$0xff] %v407
    %434 = vst [vmem:[#allocation8 + $0x70] sm:$0xff] %v412
    %435 = vst [vmem:[#allocation8 + $0x78] sm:$0xff] %v417
    // Predicated region
    $region30: #{tpu_custom_call.1} parent=1 // pred_check
      _
    $region31: #{tpu_custom_call.1} parent=1 // pred_check_branch
      %437 = sbr.rel (0) target = $region33
    $region32: #{tpu_custom_call.1} parent=1 // pred_region
      %s439 = ssub.s32 2048, 2048
      %440 = vsyncadd [#allocation4], %s439
      %s441 = sshll.u32 [#allocation8], 4
      %s442 = int_to_ptr.vmem [resolvable:$true] %s441
      %447 = dma.vmem_to_hbm [thread:$0]  %s442, 2048, %s4, [#allocation4], 128, 128, 8
    $region33: #{tpu_custom_call.1} parent=1 // pred_fallthru
      _
    // Predicated region
    $region34: #{tpu_custom_call.1} parent=1 // pred_check
      _
    $region35: #{tpu_custom_call.1} parent=1 // pred_check_branch
      %449 = sbr.rel (0) target = $region37
    $region36: #{tpu_custom_call.1} parent=1 // pred_region
      %450 = dma.done [#allocation4], 2048
    $region37: #{tpu_custom_call.1} parent=1 // pred_fallthru
      _
    %451 = vsyncpa [#allocation3], 1
    %452 = vsyncpa [#allocation6], 1
    %453 = vsyncpa [#allocation4], 1

</llo_original>
